<compile_context>
chip_gen: v5e
topology: v5e:2x2
jax: 0.10.0
libtpu: 0.0.40
codegen_flags: <defaults>
</compile_context>

<pallas_src>
import jax
import jax.numpy as jnp
from jax.experimental import pallas as pl
from jax.experimental.pallas import tpu as pltpu


def _rprelu_kernel(x_ref, p_ref, o_ref):
    # x_ref/o_ref: (tr, ts) tile.  p_ref: (3, tr, 1) -> [gamma, beta1, beta2]
    # per-row values, broadcast across the (lane-dense) spatial axis.
    g = p_ref[0]          # (tr, 1)
    b1 = p_ref[1]         # (tr, 1)
    b2 = p_ref[2]         # (tr, 1)
    x = x_ref[...] + b1
    o_ref[...] = jnp.where(x > 0, x + b2, x * g + b2)


def _pick_tile(dim, unit, cap):
    """Largest multiple of `unit` that divides `dim` and is <= cap.

    Falls back to the full dimension if `dim` is not a multiple of `unit`
    (a full-extent block is always a legal BlockSpec).
    """
    if dim % unit != 0:
        return dim
    cap = max(cap, unit)
    best = unit
    t = unit
    while t <= min(dim, cap):
        if dim % t == 0:
            best = t
        t += unit
    return best


def rprelu(x, gamma, beta1, beta2):
    """x: (N, C, D, H, W); gamma/beta1/beta2: (C,). Returns same shape/dtype as x."""
    N, C, D, H, W = x.shape
    rows = N * C
    S = D * H * W
    dtype = x.dtype
    itemsize = jnp.dtype(dtype).itemsize

    # Free, contiguous reshape (no transpose / no extra HBM pass).
    x2 = x.reshape(rows, S)

    # Per-row params: row r = n*C + c  ->  channel c.  Pack the three params
    # into a single (3, rows, 1) array so the kernel has one tiny input stream.
    params = jnp.stack(
        [
            jnp.tile(gamma.astype(dtype), N),
            jnp.tile(beta1.astype(dtype), N),
            jnp.tile(beta2.astype(dtype), N),
        ],
        axis=0,
    ).reshape(3, rows, 1)

    # --- tile selection -------------------------------------------------
    # Target ~4 MiB blocks: input+output double-buffered -> ~16 MiB of VMEM,
    # which fits every generation (incl. v7x's 64 MiB) with the limit below.
    max_block_bytes = 4 * 1024 * 1024
    max_block_elems = max_block_bytes // itemsize
    sub = max(8, 32 // itemsize)          # sublane multiple: 8 f32, 16 bf16, ...

    tr = _pick_tile(rows, sub, min(rows, 512))          # row (sublane) tile
    ts = _pick_tile(S, 128, max(128, max_block_elems // tr))  # spatial (lane) tile

    grid = (rows // tr, S // ts)

    out2 = pl.pallas_call(
        _rprelu_kernel,
        out_shape=jax.ShapeDtypeStruct((rows, S), dtype),
        grid=grid,
        in_specs=[
            pl.BlockSpec((tr, ts), lambda r, t: (r, t)),
            pl.BlockSpec((3, tr, 1), lambda r, t: (0, r, 0)),
        ],
        out_specs=pl.BlockSpec((tr, ts), lambda r, t: (r, t)),
        compiler_params=pltpu.CompilerParams(
            dimension_semantics=("parallel", "parallel"),
            vmem_limit_bytes=32 * 1024 * 1024,
        ),
    )(x2, params)

    # Free, contiguous reshape back to NCDHW.
    return out2.reshape(N, C, D, H, W)


def rprelu_ref(x, gamma, beta1, beta2):
    g = gamma.reshape(1, -1, 1, 1, 1)
    b1 = beta1.reshape(1, -1, 1, 1, 1)
    b2 = beta2.reshape(1, -1, 1, 1, 1)
    xp = x + b1
    return jnp.where(xp > 0, xp + b2, xp * g + b2)


if __name__ == "__main__":
    key = jax.random.PRNGKey(0)
    N, C, D, H, W = 2, 4, 4, 8, 8
    kx, kb1, kb2 = jax.random.split(key, 3)

    x = jax.random.normal(kx, (N, C, D, H, W), dtype=jnp.float32)
    # Parameter init mirroring nn.Parameter shapes (1,C,1,1,1):
    gamma = jnp.full((C,), 0.25, dtype=jnp.float32)
    beta1 = 0.1 * jax.random.normal(kb1, (C,), dtype=jnp.float32)
    beta2 = 0.1 * jax.random.normal(kb2, (C,), dtype=jnp.float32)

    out = rprelu(x, gamma, beta1, beta2)
    jax.block_until_ready(out)

    ref = rprelu_ref(x, gamma, beta1, beta2)
    assert out.shape == x.shape
    assert jnp.allclose(out, ref, atol=1e-6, rtol=1e-6)
    print("KERNEL_OK")
</pallas_src>

<mosaic_0001>
module attributes {stable_mosaic.version = 11 : i64} {
  func.func @_rprelu_kernel(%arg0: i32, %arg1: i32, %arg2: memref<8x256xf32, #tpu.memory_space<vmem>>, %arg3: memref<3x8x1xf32, #tpu.memory_space<vmem>>, %arg4: memref<8x256xf32, #tpu.memory_space<vmem>>) attributes {dimension_semantics = [#tpu.dimension_semantics<parallel>, #tpu.dimension_semantics<parallel>], iteration_bounds = array<i64: 1, 1>, scalar_prefetch = 0 : i64, scratch_operands = 0 : i64, tpu.core_type = #tpu.core_type<tc>, window_params = [{transform_indices = @transform_0, window_bounds = array<i64: 8, 256>}, {transform_indices = @transform_1, window_bounds = array<i64: 3, 8, 1>}, {transform_indices = @transform_2, window_bounds = array<i64: 8, 256>}]} {
    %c0 = arith.constant 0 : index
    %c0_0 = arith.constant 0 : index
    %c0_1 = arith.constant 0 : index
    %0 = vector.load %arg3[%c0, %c0_0, %c0_1] : memref<3x8x1xf32, #tpu.memory_space<vmem>>, vector<1x8x1xf32>
    %1 = vector.shape_cast %0 : vector<1x8x1xf32> to vector<8x1xf32>
    %c1 = arith.constant 1 : index
    %c0_2 = arith.constant 0 : index
    %c0_3 = arith.constant 0 : index
    %2 = vector.load %arg3[%c1, %c0_2, %c0_3] : memref<3x8x1xf32, #tpu.memory_space<vmem>>, vector<1x8x1xf32>
    %3 = vector.shape_cast %2 : vector<1x8x1xf32> to vector<8x1xf32>
    %c2 = arith.constant 2 : index
    %c0_4 = arith.constant 0 : index
    %c0_5 = arith.constant 0 : index
    %4 = vector.load %arg3[%c2, %c0_4, %c0_5] : memref<3x8x1xf32, #tpu.memory_space<vmem>>, vector<1x8x1xf32>
    %5 = vector.shape_cast %4 : vector<1x8x1xf32> to vector<8x1xf32>
    %c0_6 = arith.constant 0 : index
    %c0_7 = arith.constant 0 : index
    %6 = vector.load %arg2[%c0_6, %c0_7] : memref<8x256xf32, #tpu.memory_space<vmem>>, vector<8x256xf32>
    %7 = vector.broadcast %3 : vector<8x1xf32> to vector<8x256xf32>
    %8 = arith.addf %6, %7 : vector<8x256xf32>
    %cst = arith.constant 0.000000e+00 : f32
    %9 = vector.broadcast %cst : f32 to vector<8x256xf32>
    %10 = arith.cmpf ogt, %8, %9 : vector<8x256xf32>
    %11 = vector.broadcast %5 : vector<8x1xf32> to vector<8x256xf32>
    %12 = arith.addf %8, %11 : vector<8x256xf32>
    %13 = vector.broadcast %1 : vector<8x1xf32> to vector<8x256xf32>
    %14 = arith.mulf %8, %13 : vector<8x256xf32>
    %15 = vector.broadcast %5 : vector<8x1xf32> to vector<8x256xf32>
    %16 = arith.addf %14, %15 : vector<8x256xf32>
    %17 = arith.select %10, %12, %16 : vector<8x256xi1>, vector<8x256xf32>
    %c0_8 = arith.constant 0 : index
    %c0_9 = arith.constant 0 : index
    %18 = vector.load %arg4[%c0_8, %c0_9] : memref<8x256xf32, #tpu.memory_space<vmem>>, vector<8x256xf32>
    tpu.vector_store %arg4[%c0_8, %c0_9], %17 {strides = array<i32>} : memref<8x256xf32, #tpu.memory_space<vmem>>, vector<8x256xf32>,
    return
  }
  func.func @transform_0(%arg0: i32, %arg1: i32) -> (i32, i32) {
    %c0_i32 = arith.constant 0 : i32
    return %arg0, %arg1 : i32, i32
  }
  func.func @transform_1(%arg0: i32, %arg1: i32) -> (i32, i32, i32) {
    %c0_i32 = arith.constant 0 : i32
    %c0_i32_0 = arith.constant 0 : i32
    %c0_i32_1 = arith.constant 0 : i32
    return %c0_i32, %arg0, %c0_i32_0 : i32, i32, i32
  }
  func.func @transform_2(%arg0: i32, %arg1: i32) -> (i32, i32) {
    %c0_i32 = arith.constant 0 : i32
    return %arg0, %arg1 : i32, i32
  }
}

</mosaic_0001>

<llo_original>
// kernel: tpu_custom_call.1
$region0: #{tpu_custom_call.1}
  #allocation0 [shape = 'u32[]', space=smem, size = 0x4, offset = 0x4, fixed_abs, tag = 'smem constant byte address 0x4 - core index']
  #allocation1 [shape = 'u32[72,128]{1,0:T(1,128)}', space=vmem, size = 0x9000, scoped, tag = 'internal scratch']
  %s0 = inlined_call_operand.vmem [shape: f32[8,256], index: 0, kind: input, shape index: {}]
  %s1 = inlined_call_operand.vmem [shape: f32[3,8,1], index: 1, kind: input, shape index: {}]
  %s2 = inlined_call_operand.hbm [shape: f32[8,256], index: 2, kind: output, shape index: {}]
  %s3 = sld [smem:[#allocation0]]
  $region18: #{tpu_custom_call.1} parent=0
    _
  %s5 = ssub.s32 1, %s3
  %s6 = scalar_select 0, %s5, %s3
  $region1: #{tpu_custom_call.1} parent=0
    #allocation2 [shape = 'u8[8192]{0}', space=vmem, size = 0x2000, scoped, tag = 'output window, operand 0, single buffered']
    #allocation3 [shape = 's32[1]{0}', space=sflag, size = 0x4, scoped, tag = 'scoped memory for tpu_custom_call.1']
    %7 = vsyncpa [#allocation3], 0
    // Predicated region
    $region2: #{tpu_custom_call.1} parent=1 // pred_check
      _
    $region3: #{tpu_custom_call.1} parent=1 // pred_check_branch
      %9 = sbr.rel (0) target = $region5
    $region4: #{tpu_custom_call.1} parent=1 // pred_region
      _
    $region5: #{tpu_custom_call.1} parent=1 // pred_fallthru
      _
    // Predicated region
    $region6: #{tpu_custom_call.1} parent=1 // pred_check
      _
    $region7: #{tpu_custom_call.1} parent=1 // pred_check_branch
      %11 = sbr.rel (0) target = $region9
    $region8: #{tpu_custom_call.1} parent=1 // pred_region
      _
    $region9: #{tpu_custom_call.1} parent=1 // pred_fallthru
      _
    %v12 = vld [vmem:[%s1] sm:$0xff]
    %s13 = scalar_lea.vmem %s1, 8
    %v14 = vld [vmem:[%s13] sm:$0xff]
    %s15 = scalar_lea.vmem %s1, 16
    %v16 = vld [vmem:[%s15] sm:$0xff]
    %v17 = vld [vmem:[%s0] sm:$0xff]
    %v18 = vld [vmem:[%s0 + $0x8] sm:$0xff]
    %20 = vset.pattern.permute.xlu0 0
    %21 = vperm.xlu0 %20, %v14
    %v22 = vpop.permute.xlu0 %21
    %v24 = vadd.f32 %v17, %v22
    %v25 = vadd.f32 %v18, %v22
    %vm26 = vcmp.gt.f32.partialorder %v24, 0.0
    %vm27 = vcmp.gt.f32.partialorder %v25, 0.0
    %29 = vset.pattern.permute.xlu0 0
    %30 = vperm.xlu0 %29, %v16
    %v31 = vpop.permute.xlu0 %30
    %v33 = vadd.f32 %v24, %v31
    %v34 = vadd.f32 %v25, %v31
    %36 = vset.pattern.permute.xlu0 0
    %37 = vperm.xlu0 %36, %v12
    %v38 = vpop.permute.xlu0 %37
    %v40 = vmul.f32 %v24, %v38
    %v41 = vmul.f32 %v25, %v38
    %v42 = vadd.f32 %v40, %v31
    %v43 = vadd.f32 %v41, %v31
    %v44 = vsel %vm26, %v33, %v42
    %v45 = vsel %vm27, %v34, %v43
    %46 = vst [vmem:[#allocation2] sm:$0xff] %v44
    %47 = vst [vmem:[#allocation2 + $0x8] sm:$0xff] %v45
    // Predicated region
    $region10: #{tpu_custom_call.1} parent=1 // pred_check
      _
    $region11: #{tpu_custom_call.1} parent=1 // pred_check_branch
      %49 = sbr.rel (0) target = $region13
    $region12: #{tpu_custom_call.1} parent=1 // pred_region
      %51 = vsyncadd [#allocation3], 0
      %s53 = sshll.u32 [#allocation2], 4
      %s54 = int_to_ptr.vmem [resolvable:$true] %s53
      %s55 = sshll.u32 %s2, 4
      %s56 = int_to_ptr.hbm [resolvable:$true] %s55
      %58 = dma.vmem_to_hbm [thread:$0]  %s54, 256, %s56, [#allocation3]
    $region13: #{tpu_custom_call.1} parent=1 // pred_fallthru
      _
    // Predicated region
    $region14: #{tpu_custom_call.1} parent=1 // pred_check
      _
    $region15: #{tpu_custom_call.1} parent=1 // pred_check_branch
      %60 = sbr.rel (0) target = $region17
    $region16: #{tpu_custom_call.1} parent=1 // pred_region
      %62 = dma.done [#allocation3], 256
    $region17: #{tpu_custom_call.1} parent=1 // pred_fallthru
      _
    %63 = vsyncpa [#allocation3], 1

</llo_original>
